<compile_context>
chip_gen: v5e
topology: v5e:2x2
jax: 0.10.0
libtpu: 0.0.40
codegen_flags: <defaults>
</compile_context>

<pallas_src>
import functools

import jax
import jax.numpy as jnp
from jax.experimental import pallas as pl
from jax.experimental.pallas import tpu as pltpu

GAMMA = 2.0            # fixed: beta = (1 - pt)^2
EPS = 1e-10
UNKNOWN_CLASS = 2
FOCAL_WEIGHT = 1.0     # CombinedLoss.__init__ defaults
DT_WEIGHT = 0.1

_LANE = 128
_MAX_ROWS_PER_TILE = 512           # 512 * 128 = 65536 pixels per pipeline step (multiple of 8)
_VMEM_LIMIT_BYTES = 48 * 1024 * 1024


def _combined_loss_kernel(pred_ref, tgt_ref,
                          fsum_ref, bsum_ref, dsum_ref, csum_ref, *,
                          num_classes, r_tile, tiles_per_group,
                          rows_valid, needs_mask, lane_pad):
    g = pl.program_id(1)
    k = pl.program_id(2)

    logits = pred_ref[...].astype(jnp.float32)        # (C, R, 128), bf16 -> f32 in-kernel
    tgt = tgt_ref[...]                                 # (R, 128) int32

    # ---- softmax pieces over the class (leading) axis: pure VPU/EUP, no XLU gathers ----
    m = jnp.max(logits, axis=0)                        # (R, 128)
    shifted = logits - m[None]                         # (C, R, 128)
    ex = jnp.exp(shifted)                              # (C, R, 128)
    log_denom = jnp.log(jnp.sum(ex, axis=0))           # (R, 128)

    # ---- target-class shifted logit via per-class selects (no one-hot) ----
    sel_shift = shifted[num_classes - 1]
    for cc in range(num_classes - 2, -1, -1):
        sel_shift = jnp.where(tgt == cc, shifted[cc], sel_shift)

    logpt = sel_shift - log_denom                      # log softmax at target class
    pt = jnp.exp(logpt)                                # EUP; exactly consistent with logpt
    one_minus = 1.0 - pt
    beta = one_minus * one_minus                       # (1 - pt)^gamma, gamma = 2
    focal_term = -beta * logpt

    # ---- unknown-region masked L1 (p_unknown in [0,1] => abs dropped) ----
    p_unk = jnp.exp(shifted[UNKNOWN_CLASS] - log_denom)
    unk_mask = (tgt == UNKNOWN_CLASS).astype(jnp.float32)
    dt_term = unk_mask * (1.0 - p_unk)

    # ---- accumulator pattern: (1,128) partial sums live in the output refs ----
    @pl.when(k == 0)
    def _():
        fsum_ref[...] = jnp.zeros_like(fsum_ref)
        bsum_ref[...] = jnp.zeros_like(bsum_ref)
        dsum_ref[...] = jnp.zeros_like(dsum_ref)
        csum_ref[...] = jnp.zeros_like(csum_ref)

    def accumulate(f_t, b_t, d_t, c_t):
        # sublane (row) reduction rides the idle XLU; accumulators stay (1, 128)
        fsum_ref[...] += jnp.sum(f_t, axis=0, keepdims=True)
        bsum_ref[...] += jnp.sum(b_t, axis=0, keepdims=True)
        dsum_ref[...] += jnp.sum(d_t, axis=0, keepdims=True)
        csum_ref[...] += jnp.sum(c_t, axis=0, keepdims=True)

    if needs_mask:
        # Unclamped global row offset of this tile (clamping only happens in the index_map,
        # so fully out-of-range duplicate tiles are masked to zero here).
        row0 = (g * tiles_per_group + k) * r_tile
        if lane_pad:
            tile_ragged = (row0 + r_tile) >= rows_valid   # last real row carries lane padding
        else:
            tile_ragged = (row0 + r_tile) > rows_valid

        @pl.when(jnp.logical_not(tile_ragged))
        def _():
            accumulate(focal_term, beta, dt_term, unk_mask)

        @pl.when(tile_ragged)
        def _():
            rows = jax.lax.broadcasted_iota(jnp.int32, (r_tile, _LANE), 0)
            valid = (row0 + rows) < rows_valid
            if lane_pad:
                valid = jnp.logical_and(valid, tgt >= 0)   # padded lanes carry label -1
            z = jnp.float32(0.0)
            accumulate(jnp.where(valid, focal_term, z),
                       jnp.where(valid, beta, z),
                       jnp.where(valid, dt_term, z),
                       jnp.where(valid, unk_mask, z))
    else:
        accumulate(focal_term, beta, dt_term, unk_mask)


def combined_loss(pred, target, focal_weight=FOCAL_WEIGHT, dt_weight=DT_WEIGHT):
    """pred: (N, C, H, W) logits (any float dtype, bf16 preferred);
    target: (N, H, W) int labels in {0, 1, 2}."""
    n, c, h, w = pred.shape
    assert c > UNKNOWN_CLASS, "trimap CombinedLoss expects >= 3 classes"
    hw = h * w

    # ---- pixel-axis layout: rows of 128 lanes (free reshape when HW % 128 == 0) ----
    lane_pad = (hw % _LANE) != 0
    if lane_pad:
        # Rare fallback (HW not a multiple of 128): pad one partial lane row.
        hw_pad = -(-hw // _LANE) * _LANE
        pred_r = jnp.pad(pred.reshape(n, c, hw), ((0, 0), (0, 0), (0, hw_pad - hw)))
        tgt_r = jnp.pad(target.astype(jnp.int32).reshape(n, hw),
                        ((0, 0), (0, hw_pad - hw)), constant_values=-1)
        hw = hw_pad
    else:
        pred_r = pred.reshape(n, c, hw)                       # metadata-only reshape
        tgt_r = target.astype(jnp.int32).reshape(n, hw)       # no int8 round-trip

    rows = hw // _LANE
    pred_r = pred_r.reshape(n, c, rows, _LANE)
    tgt_r = tgt_r.reshape(n, rows, _LANE)

    # ---- pixel tiling ----
    if rows <= _MAX_ROWS_PER_TILE:
        r_tile, n_tiles = rows, 1
    else:
        r_tile = _MAX_ROWS_PER_TILE                           # multiple of 8
        n_tiles = -(-rows // r_tile)

    # ---- optional 2-way pixel-group split so a v7x megacore stays balanced at odd/small N ----
    n_groups = 2 if (n % 2 == 1 and n_tiles >= 2) else 1
    tiles_per_group = -(-n_tiles // n_groups)
    total_grid_tiles = n_groups * tiles_per_group
    needs_mask = lane_pad or (total_grid_tiles * r_tile != rows)

    def tile_index(g, k):
        t = g * tiles_per_group + k
        if total_grid_tiles != n_tiles:
            t = jnp.minimum(t, n_tiles - 1)    # never issue a fully out-of-bounds block fetch
        return t

    def pred_map(i, g, k):
        return (i, 0, tile_index(g, k), 0)

    def tgt_map(i, g, k):
        return (i, tile_index(g, k), 0)

    def out_map(i, g, k):
        return (i, g, 0, 0)                     # constant across k -> resident accumulator

    kernel = functools.partial(
        _combined_loss_kernel,
        num_classes=c, r_tile=r_tile, tiles_per_group=tiles_per_group,
        rows_valid=rows, needs_mask=needs_mask, lane_pad=lane_pad)

    out_shape = jax.ShapeDtypeStruct((n, n_groups, 1, _LANE), jnp.float32)
    out_spec = pl.BlockSpec((pl.Squeezed(), pl.Squeezed(), 1, _LANE), out_map)

    fsum, bsum, dsum, csum = pl.pallas_call(
        kernel,
        out_shape=(out_shape, out_shape, out_shape, out_shape),
        grid_spec=pltpu.PrefetchScalarGridSpec(
            num_scalar_prefetch=0,
            grid=(n, n_groups, tiles_per_group),
            in_specs=[
                pl.BlockSpec((pl.Squeezed(), c, r_tile, _LANE), pred_map),
                pl.BlockSpec((pl.Squeezed(), r_tile, _LANE), tgt_map),
            ],
            out_specs=(out_spec, out_spec, out_spec, out_spec),
        ),
        compiler_params=pltpu.CompilerParams(
            dimension_semantics=("parallel", "parallel", "arbitrary"),
            vmem_limit_bytes=_VMEM_LIMIT_BYTES),
    )(pred_r, tgt_r)

    # ---- tiny wrapper-side combine: lane + group reduce, per-sample normalize, batch mean ----
    f = jnp.sum(fsum, axis=(1, 2, 3))
    b = jnp.sum(bsum, axis=(1, 2, 3))
    d = jnp.sum(dsum, axis=(1, 2, 3))
    cnt = jnp.sum(csum, axis=(1, 2, 3))
    focal_loss = jnp.mean(f / (b + EPS))
    dt_loss = jnp.mean(d / (cnt + EPS))
    total = focal_weight * focal_loss + dt_weight * dt_loss
    # mirrors CombinedLoss.forward: (weighted sum, dict of components)
    return total, {'focal_loss': focal_loss, 'dt_loss': dt_loss}


def _reference(pred, target):
    """Pure-JAX reference of the same forward semantics (same masked-L1 surrogate)."""
    logits = pred.astype(jnp.float32)
    logp = jax.nn.log_softmax(logits, axis=1)
    tgt = target.astype(jnp.int32)
    logpt = jnp.take_along_axis(logp, tgt[:, None], axis=1)[:, 0]     # (N, H, W)
    pt = jnp.exp(logpt)
    beta = (1.0 - pt) ** 2
    focal = jnp.mean(jnp.sum(-beta * logpt, axis=(1, 2)) /
                     (jnp.sum(beta, axis=(1, 2)) + EPS))
    p_unk = jnp.exp(logp[:, UNKNOWN_CLASS])
    mask = (tgt == UNKNOWN_CLASS).astype(jnp.float32)
    dt = jnp.mean(jnp.sum(mask * (1.0 - p_unk), axis=(1, 2)) /
                  (jnp.sum(mask, axis=(1, 2)) + EPS))
    return FOCAL_WEIGHT * focal + DT_WEIGHT * dt, focal, dt


if __name__ == "__main__":
    key = jax.random.PRNGKey(0)
    k_pred, k_tgt = jax.random.split(key)

    N, C, H, W = 2, 3, 16, 16          # trimap: 3 classes (bg, fg, unknown)
    pred = jax.random.normal(k_pred, (N, C, H, W), dtype=jnp.float32).astype(jnp.bfloat16)
    target = jax.random.randint(k_tgt, (N, H, W), minval=0, maxval=C, dtype=jnp.int32)

    total, aux = combined_loss(pred, target)
    total = jax.block_until_ready(total)
    jax.block_until_ready(aux['focal_loss'])
    jax.block_until_ready(aux['dt_loss'])

    ref_total, ref_focal, ref_dt = _reference(pred, target)

    assert total.shape == ()
    assert bool(jnp.isfinite(total))
    assert bool(jnp.allclose(total, ref_total, rtol=2e-2, atol=1e-3)), (total, ref_total)
    assert bool(jnp.allclose(aux['focal_loss'], ref_focal, rtol=2e-2, atol=1e-3))
    assert bool(jnp.allclose(aux['dt_loss'], ref_dt, rtol=2e-2, atol=1e-3))
    print("KERNEL_OK")
</pallas_src>

<mosaic_0001>
module attributes {stable_mosaic.version = 11 : i64} {
  func.func @_combined_loss_kernel(%arg0: i32, %arg1: i32, %arg2: i32, %arg3: memref<1x3x2x128xbf16, #tpu.memory_space<vmem>>, %arg4: memref<1x2x128xi32, #tpu.memory_space<vmem>>, %arg5: memref<1x1x1x128xf32, #tpu.memory_space<vmem>>, %arg6: memref<1x1x1x128xf32, #tpu.memory_space<vmem>>, %arg7: memref<1x1x1x128xf32, #tpu.memory_space<vmem>>, %arg8: memref<1x1x1x128xf32, #tpu.memory_space<vmem>>) attributes {dimension_semantics = [#tpu.dimension_semantics<parallel>, #tpu.dimension_semantics<parallel>, #tpu.dimension_semantics<arbitrary>], iteration_bounds = array<i64: 2, 1, 1>, scalar_prefetch = 0 : i64, scratch_operands = 0 : i64, tpu.core_type = #tpu.core_type<tc>, window_params = [{transform_indices = @transform_0, window_bounds = array<i64: 1, 3, 2, 128>}, {transform_indices = @transform_1, window_bounds = array<i64: 1, 2, 128>}, {transform_indices = @transform_2, window_bounds = array<i64: 1, 1, 1, 128>}, {transform_indices = @transform_3, window_bounds = array<i64: 1, 1, 1, 128>}, {transform_indices = @transform_4, window_bounds = array<i64: 1, 1, 1, 128>}, {transform_indices = @transform_5, window_bounds = array<i64: 1, 1, 1, 128>}]} {
    %c0 = arith.constant 0 : index
    %c0_0 = arith.constant 0 : index
    %c0_1 = arith.constant 0 : index
    %c0_2 = arith.constant 0 : index
    %0 = vector.load %arg3[%c0, %c0_0, %c0_1, %c0_2] : memref<1x3x2x128xbf16, #tpu.memory_space<vmem>>, vector<1x3x2x128xbf16>
    %1 = vector.shape_cast %0 : vector<1x3x2x128xbf16> to vector<3x2x128xbf16>
    %2 = arith.extf %1 : vector<3x2x128xbf16> to vector<3x2x128xf32>
    %c0_3 = arith.constant 0 : index
    %c0_4 = arith.constant 0 : index
    %c0_5 = arith.constant 0 : index
    %3 = vector.load %arg4[%c0_3, %c0_4, %c0_5] : memref<1x2x128xi32, #tpu.memory_space<vmem>>, vector<1x2x128xi32>
    %4 = vector.shape_cast %3 : vector<1x2x128xi32> to vector<2x128xi32>
    %cst = arith.constant dense<0xFF800000> : vector<2x128xf32>
    %5 = vector.multi_reduction <maximumf>, %2, %cst [0] : vector<3x2x128xf32> to vector<2x128xf32>
    %6 = vector.shape_cast %5 : vector<2x128xf32> to vector<1x2x128xf32>
    %7 = vector.broadcast %6 : vector<1x2x128xf32> to vector<3x2x128xf32>
    %8 = arith.subf %2, %7 : vector<3x2x128xf32>
    %9 = math.exp %8 : vector<3x2x128xf32>
    %cst_6 = arith.constant dense<0.000000e+00> : vector<2x128xf32>
    %10 = vector.multi_reduction <add>, %9, %cst_6 [0] : vector<3x2x128xf32> to vector<2x128xf32>
    %11 = math.log %10 : vector<2x128xf32>
    %12 = vector.extract_strided_slice %8 {offsets = [2, 0, 0], sizes = [1, 2, 128], strides = [1, 1, 1]} : vector<3x2x128xf32> to vector<1x2x128xf32>
    %13 = vector.shape_cast %12 : vector<1x2x128xf32> to vector<2x128xf32>
    %c1_i32 = arith.constant 1 : i32
    %14 = vector.broadcast %c1_i32 : i32 to vector<2x128xi32>
    %15 = arith.cmpi eq, %4, %14 : vector<2x128xi32>
    %16 = vector.extract_strided_slice %8 {offsets = [1, 0, 0], sizes = [1, 2, 128], strides = [1, 1, 1]} : vector<3x2x128xf32> to vector<1x2x128xf32>
    %17 = vector.shape_cast %16 : vector<1x2x128xf32> to vector<2x128xf32>
    %18 = arith.select %15, %17, %13 : vector<2x128xi1>, vector<2x128xf32>
    %c0_i32 = arith.constant 0 : i32
    %19 = vector.broadcast %c0_i32 : i32 to vector<2x128xi32>
    %20 = arith.cmpi eq, %4, %19 : vector<2x128xi32>
    %21 = vector.extract_strided_slice %8 {offsets = [0, 0, 0], sizes = [1, 2, 128], strides = [1, 1, 1]} : vector<3x2x128xf32> to vector<1x2x128xf32>
    %22 = vector.shape_cast %21 : vector<1x2x128xf32> to vector<2x128xf32>
    %23 = arith.select %20, %22, %18 : vector<2x128xi1>, vector<2x128xf32>
    %24 = arith.subf %23, %11 : vector<2x128xf32>
    %25 = math.exp %24 : vector<2x128xf32>
    %cst_7 = arith.constant 1.000000e+00 : f32
    %26 = vector.broadcast %cst_7 : f32 to vector<2x128xf32>
    %27 = arith.subf %26, %25 : vector<2x128xf32>
    %28 = arith.mulf %27, %27 : vector<2x128xf32>
    %cst_8 = arith.constant 0.000000e+00 : f32
    %29 = vector.broadcast %cst_8 : f32 to vector<2x128xf32>
    %30 = arith.subf %29, %28 : vector<2x128xf32>
    %31 = arith.mulf %30, %24 : vector<2x128xf32>
    %32 = vector.extract_strided_slice %8 {offsets = [2, 0, 0], sizes = [1, 2, 128], strides = [1, 1, 1]} : vector<3x2x128xf32> to vector<1x2x128xf32>
    %33 = vector.shape_cast %32 : vector<1x2x128xf32> to vector<2x128xf32>
    %34 = arith.subf %33, %11 : vector<2x128xf32>
    %35 = math.exp %34 : vector<2x128xf32>
    %c2_i32 = arith.constant 2 : i32
    %36 = vector.broadcast %c2_i32 : i32 to vector<2x128xi32>
    %37 = arith.cmpi eq, %4, %36 : vector<2x128xi32>
    %38 = arith.extui %37 : vector<2x128xi1> to vector<2x128xi32>
    %39 = arith.sitofp %38 : vector<2x128xi32> to vector<2x128xf32>
    %cst_9 = arith.constant 1.000000e+00 : f32
    %40 = vector.broadcast %cst_9 : f32 to vector<2x128xf32>
    %41 = arith.subf %40, %35 : vector<2x128xf32>
    %42 = arith.mulf %39, %41 : vector<2x128xf32>
    %c0_i32_10 = arith.constant 0 : i32
    %43 = arith.cmpi eq, %arg2, %c0_i32_10 : i32
    %44 = arith.extui %43 : i1 to i32
    %c0_i32_11 = arith.constant 0 : i32
    %45 = arith.cmpi ne, %44, %c0_i32_11 : i32
    scf.if %45 {
      %cst_48 = arith.constant 0.000000e+00 : f32
      %78 = vector.broadcast %cst_48 : f32 to vector<1x128xf32>
      %c0_49 = arith.constant 0 : index
      %c0_50 = arith.constant 0 : index
      %c0_51 = arith.constant 0 : index
      %c0_52 = arith.constant 0 : index
      %79 = vector.load %arg5[%c0_49, %c0_50, %c0_51, %c0_52] : memref<1x1x1x128xf32, #tpu.memory_space<vmem>>, vector<1x1x1x128xf32>
      %80 = vector.shape_cast %79 : vector<1x1x1x128xf32> to vector<1x128xf32>
      %81 = vector.shape_cast %78 : vector<1x128xf32> to vector<1x1x1x128xf32>
      tpu.vector_store %arg5[%c0_49, %c0_50, %c0_51, %c0_52], %81 {strides = array<i32>} : memref<1x1x1x128xf32, #tpu.memory_space<vmem>>, vector<1x1x1x128xf32>,
      %cst_53 = arith.constant 0.000000e+00 : f32
      %82 = vector.broadcast %cst_53 : f32 to vector<1x128xf32>
      %c0_54 = arith.constant 0 : index
      %c0_55 = arith.constant 0 : index
      %c0_56 = arith.constant 0 : index
      %c0_57 = arith.constant 0 : index
      %83 = vector.load %arg6[%c0_54, %c0_55, %c0_56, %c0_57] : memref<1x1x1x128xf32, #tpu.memory_space<vmem>>, vector<1x1x1x128xf32>
      %84 = vector.shape_cast %83 : vector<1x1x1x128xf32> to vector<1x128xf32>
      %85 = vector.shape_cast %82 : vector<1x128xf32> to vector<1x1x1x128xf32>
      tpu.vector_store %arg6[%c0_54, %c0_55, %c0_56, %c0_57], %85 {strides = array<i32>} : memref<1x1x1x128xf32, #tpu.memory_space<vmem>>, vector<1x1x1x128xf32>,
      %cst_58 = arith.constant 0.000000e+00 : f32
      %86 = vector.broadcast %cst_58 : f32 to vector<1x128xf32>
      %c0_59 = arith.constant 0 : index
      %c0_60 = arith.constant 0 : index
      %c0_61 = arith.constant 0 : index
      %c0_62 = arith.constant 0 : index
      %87 = vector.load %arg7[%c0_59, %c0_60, %c0_61, %c0_62] : memref<1x1x1x128xf32, #tpu.memory_space<vmem>>, vector<1x1x1x128xf32>
      %88 = vector.shape_cast %87 : vector<1x1x1x128xf32> to vector<1x128xf32>
      %89 = vector.shape_cast %86 : vector<1x128xf32> to vector<1x1x1x128xf32>
      tpu.vector_store %arg7[%c0_59, %c0_60, %c0_61, %c0_62], %89 {strides = array<i32>} : memref<1x1x1x128xf32, #tpu.memory_space<vmem>>, vector<1x1x1x128xf32>,
      %cst_63 = arith.constant 0.000000e+00 : f32
      %90 = vector.broadcast %cst_63 : f32 to vector<1x128xf32>
      %c0_64 = arith.constant 0 : index
      %c0_65 = arith.constant 0 : index
      %c0_66 = arith.constant 0 : index
      %c0_67 = arith.constant 0 : index
      %91 = vector.load %arg8[%c0_64, %c0_65, %c0_66, %c0_67] : memref<1x1x1x128xf32, #tpu.memory_space<vmem>>, vector<1x1x1x128xf32>
      %92 = vector.shape_cast %91 : vector<1x1x1x128xf32> to vector<1x128xf32>
      %93 = vector.shape_cast %90 : vector<1x128xf32> to vector<1x1x1x128xf32>
      tpu.vector_store %arg8[%c0_64, %c0_65, %c0_66, %c0_67], %93 {strides = array<i32>} : memref<1x1x1x128xf32, #tpu.memory_space<vmem>>, vector<1x1x1x128xf32>,
    } else {
    }
    %c0_12 = arith.constant 0 : index
    %c0_13 = arith.constant 0 : index
    %c0_14 = arith.constant 0 : index
    %c0_15 = arith.constant 0 : index
    %46 = vector.load %arg5[%c0_12, %c0_13, %c0_14, %c0_15] : memref<1x1x1x128xf32, #tpu.memory_space<vmem>>, vector<1x1x1x128xf32>
    %47 = vector.shape_cast %46 : vector<1x1x1x128xf32> to vector<1x128xf32>
    %cst_16 = arith.constant dense<0.000000e+00> : vector<128xf32>
    %48 = vector.multi_reduction <add>, %31, %cst_16 [0] : vector<2x128xf32> to vector<128xf32>
    %49 = vector.shape_cast %48 : vector<128xf32> to vector<1x128xf32>
    %50 = arith.addf %47, %49 : vector<1x128xf32>
    %c0_17 = arith.constant 0 : index
    %c0_18 = arith.constant 0 : index
    %c0_19 = arith.constant 0 : index
    %c0_20 = arith.constant 0 : index
    %51 = vector.load %arg5[%c0_17, %c0_18, %c0_19, %c0_20] : memref<1x1x1x128xf32, #tpu.memory_space<vmem>>, vector<1x1x1x128xf32>
    %52 = vector.shape_cast %51 : vector<1x1x1x128xf32> to vector<1x128xf32>
    %53 = vector.shape_cast %50 : vector<1x128xf32> to vector<1x1x1x128xf32>
    tpu.vector_store %arg5[%c0_17, %c0_18, %c0_19, %c0_20], %53 {strides = array<i32>} : memref<1x1x1x128xf32, #tpu.memory_space<vmem>>, vector<1x1x1x128xf32>,
    %c0_21 = arith.constant 0 : index
    %c0_22 = arith.constant 0 : index
    %c0_23 = arith.constant 0 : index
    %c0_24 = arith.constant 0 : index
    %54 = vector.load %arg6[%c0_21, %c0_22, %c0_23, %c0_24] : memref<1x1x1x128xf32, #tpu.memory_space<vmem>>, vector<1x1x1x128xf32>
    %55 = vector.shape_cast %54 : vector<1x1x1x128xf32> to vector<1x128xf32>
    %cst_25 = arith.constant dense<0.000000e+00> : vector<128xf32>
    %56 = vector.multi_reduction <add>, %28, %cst_25 [0] : vector<2x128xf32> to vector<128xf32>
    %57 = vector.shape_cast %56 : vector<128xf32> to vector<1x128xf32>
    %58 = arith.addf %55, %57 : vector<1x128xf32>
    %c0_26 = arith.constant 0 : index
    %c0_27 = arith.constant 0 : index
    %c0_28 = arith.constant 0 : index
    %c0_29 = arith.constant 0 : index
    %59 = vector.load %arg6[%c0_26, %c0_27, %c0_28, %c0_29] : memref<1x1x1x128xf32, #tpu.memory_space<vmem>>, vector<1x1x1x128xf32>
    %60 = vector.shape_cast %59 : vector<1x1x1x128xf32> to vector<1x128xf32>
    %61 = vector.shape_cast %58 : vector<1x128xf32> to vector<1x1x1x128xf32>
    tpu.vector_store %arg6[%c0_26, %c0_27, %c0_28, %c0_29], %61 {strides = array<i32>} : memref<1x1x1x128xf32, #tpu.memory_space<vmem>>, vector<1x1x1x128xf32>,
    %c0_30 = arith.constant 0 : index
    %c0_31 = arith.constant 0 : index
    %c0_32 = arith.constant 0 : index
    %c0_33 = arith.constant 0 : index
    %62 = vector.load %arg7[%c0_30, %c0_31, %c0_32, %c0_33] : memref<1x1x1x128xf32, #tpu.memory_space<vmem>>, vector<1x1x1x128xf32>
    %63 = vector.shape_cast %62 : vector<1x1x1x128xf32> to vector<1x128xf32>
    %cst_34 = arith.constant dense<0.000000e+00> : vector<128xf32>
    %64 = vector.multi_reduction <add>, %42, %cst_34 [0] : vector<2x128xf32> to vector<128xf32>
    %65 = vector.shape_cast %64 : vector<128xf32> to vector<1x128xf32>
    %66 = arith.addf %63, %65 : vector<1x128xf32>
    %c0_35 = arith.constant 0 : index
    %c0_36 = arith.constant 0 : index
    %c0_37 = arith.constant 0 : index
    %c0_38 = arith.constant 0 : index
    %67 = vector.load %arg7[%c0_35, %c0_36, %c0_37, %c0_38] : memref<1x1x1x128xf32, #tpu.memory_space<vmem>>, vector<1x1x1x128xf32>
    %68 = vector.shape_cast %67 : vector<1x1x1x128xf32> to vector<1x128xf32>
    %69 = vector.shape_cast %66 : vector<1x128xf32> to vector<1x1x1x128xf32>
    tpu.vector_store %arg7[%c0_35, %c0_36, %c0_37, %c0_38], %69 {strides = array<i32>} : memref<1x1x1x128xf32, #tpu.memory_space<vmem>>, vector<1x1x1x128xf32>,
    %c0_39 = arith.constant 0 : index
    %c0_40 = arith.constant 0 : index
    %c0_41 = arith.constant 0 : index
    %c0_42 = arith.constant 0 : index
    %70 = vector.load %arg8[%c0_39, %c0_40, %c0_41, %c0_42] : memref<1x1x1x128xf32, #tpu.memory_space<vmem>>, vector<1x1x1x128xf32>
    %71 = vector.shape_cast %70 : vector<1x1x1x128xf32> to vector<1x128xf32>
    %cst_43 = arith.constant dense<0.000000e+00> : vector<128xf32>
    %72 = vector.multi_reduction <add>, %39, %cst_43 [0] : vector<2x128xf32> to vector<128xf32>
    %73 = vector.shape_cast %72 : vector<128xf32> to vector<1x128xf32>
    %74 = arith.addf %71, %73 : vector<1x128xf32>
    %c0_44 = arith.constant 0 : index
    %c0_45 = arith.constant 0 : index
    %c0_46 = arith.constant 0 : index
    %c0_47 = arith.constant 0 : index
    %75 = vector.load %arg8[%c0_44, %c0_45, %c0_46, %c0_47] : memref<1x1x1x128xf32, #tpu.memory_space<vmem>>, vector<1x1x1x128xf32>
    %76 = vector.shape_cast %75 : vector<1x1x1x128xf32> to vector<1x128xf32>
    %77 = vector.shape_cast %74 : vector<1x128xf32> to vector<1x1x1x128xf32>
    tpu.vector_store %arg8[%c0_44, %c0_45, %c0_46, %c0_47], %77 {strides = array<i32>} : memref<1x1x1x128xf32, #tpu.memory_space<vmem>>, vector<1x1x1x128xf32>,
    return
  }
  func.func @transform_0(%arg0: i32, %arg1: i32, %arg2: i32) -> (i32, i32, i32, i32) {
    %c1_i32 = arith.constant 1 : i32
    %0 = arith.muli %arg1, %c1_i32 : i32
    %1 = arith.addi %0, %arg2 : i32
    %c0_i32 = arith.constant 0 : i32
    %c0_i32_0 = arith.constant 0 : i32
    %c0_i32_1 = arith.constant 0 : i32
    return %arg0, %c0_i32, %1, %c0_i32_0 : i32, i32, i32, i32
  }
  func.func @transform_1(%arg0: i32, %arg1: i32, %arg2: i32) -> (i32, i32, i32) {
    %c1_i32 = arith.constant 1 : i32
    %0 = arith.muli %arg1, %c1_i32 : i32
    %1 = arith.addi %0, %arg2 : i32
    %c0_i32 = arith.constant 0 : i32
    %c0_i32_0 = arith.constant 0 : i32
    return %arg0, %1, %c0_i32 : i32, i32, i32
  }
  func.func @transform_2(%arg0: i32, %arg1: i32, %arg2: i32) -> (i32, i32, i32, i32) {
    %c0_i32 = arith.constant 0 : i32
    %c0_i32_0 = arith.constant 0 : i32
    %c0_i32_1 = arith.constant 0 : i32
    return %arg0, %arg1, %c0_i32, %c0_i32_0 : i32, i32, i32, i32
  }
  func.func @transform_3(%arg0: i32, %arg1: i32, %arg2: i32) -> (i32, i32, i32, i32) {
    %c0_i32 = arith.constant 0 : i32
    %c0_i32_0 = arith.constant 0 : i32
    %c0_i32_1 = arith.constant 0 : i32
    return %arg0, %arg1, %c0_i32, %c0_i32_0 : i32, i32, i32, i32
  }
  func.func @transform_4(%arg0: i32, %arg1: i32, %arg2: i32) -> (i32, i32, i32, i32) {
    %c0_i32 = arith.constant 0 : i32
    %c0_i32_0 = arith.constant 0 : i32
    %c0_i32_1 = arith.constant 0 : i32
    return %arg0, %arg1, %c0_i32, %c0_i32_0 : i32, i32, i32, i32
  }
  func.func @transform_5(%arg0: i32, %arg1: i32, %arg2: i32) -> (i32, i32, i32, i32) {
    %c0_i32 = arith.constant 0 : i32
    %c0_i32_0 = arith.constant 0 : i32
    %c0_i32_1 = arith.constant 0 : i32
    return %arg0, %arg1, %c0_i32, %c0_i32_0 : i32, i32, i32, i32
  }
}

</mosaic_0001>

<llo_original>
// kernel: tpu_custom_call.1
$region0: #{tpu_custom_call.1}
  #allocation0 [shape = 'u32[]', space=smem, size = 0x4, offset = 0x4, fixed_abs, tag = 'smem constant byte address 0x4 - core index']
  #allocation1 [shape = 'u32[72,128]{1,0:T(1,128)}', space=vmem, size = 0x9000, scoped, tag = 'internal scratch']
  %s0 = inlined_call_operand.hbm [shape: bf16[2,3,2,128], index: 0, kind: input, shape index: {}]
  %s1 = inlined_call_operand.hbm [shape: s32[2,2,128], index: 1, kind: input, shape index: {}]
  %s2 = inlined_call_operand.hbm [shape: f32[2,1,1,128], index: 2, kind: output, shape index: {0}]
  %s3 = inlined_call_operand.hbm [shape: f32[2,1,1,128], index: 3, kind: output, shape index: {1}]
  %s4 = inlined_call_operand.hbm [shape: f32[2,1,1,128], index: 4, kind: output, shape index: {2}]
  %s5 = inlined_call_operand.hbm [shape: f32[2,1,1,128], index: 5, kind: output, shape index: {3}]
  %6 = xla_tuple %s2, %s3, %s4, %s5
  %s7 = sld [smem:[#allocation0]]
  $region77: #{tpu_custom_call.1} parent=0
    _
  %s9 = ssub.s32 1, %s7
  %s10 = scalar_select 0, %s9, %s7
  $region1: #{tpu_custom_call.1} parent=0
    #allocation2 [shape = 'u8[3072]{0}', space=vmem, size = 0xc00, scoped, tag = 'input window, operand 0']
    #allocation3 [shape = 's32[2]{0}', space=sflag, size = 0x8, scoped, tag = 'scoped memory for tpu_custom_call.1']
    #allocation4 [shape = 's32[2]{0}', space=sflag, size = 0x8, scoped, tag = 'scoped memory for tpu_custom_call.1']
    #allocation5 [shape = 'u8[2048]{0}', space=vmem, size = 0x800, scoped, tag = 'input window, operand 1']
    #allocation6 [shape = 's32[2]{0}', space=sflag, size = 0x8, scoped, tag = 'scoped memory for tpu_custom_call.1']
    #allocation7 [shape = 'u8[1024]{0}', space=vmem, size = 0x400, scoped, tag = 'output window, operand 0']
    #allocation8 [shape = 'u8[1024]{0}', space=vmem, size = 0x400, scoped, tag = 'output window, operand 1']
    #allocation9 [shape = 's32[2]{0}', space=sflag, size = 0x8, scoped, tag = 'scoped memory for tpu_custom_call.1']
    #allocation10 [shape = 'u8[1024]{0}', space=vmem, size = 0x400, scoped, tag = 'output window, operand 2']
    #allocation11 [shape = 'u8[1024]{0}', space=vmem, size = 0x400, scoped, tag = 'output window, operand 3']
    #allocation12 [shape = 's32[2]{0}', space=sflag, size = 0x8, scoped, tag = 'scoped memory for tpu_custom_call.1']
    %11 = vsyncpa [#allocation3], 0
    %s12 = scalar_lea.sflag [#allocation3], 1
    %13 = vsyncpa %s12, 0
    %14 = vsyncpa [#allocation6], 0
    %s15 = scalar_lea.sflag [#allocation6], 1
    %16 = vsyncpa %s15, 0
    %17 = vsyncpa [#allocation4], 0
    %s18 = scalar_lea.sflag [#allocation4], 1
    %19 = vsyncpa %s18, 0
    %20 = vsyncpa [#allocation9], 0
    %s21 = scalar_lea.sflag [#allocation9], 1
    %22 = vsyncpa %s21, 0
    %23 = vsyncpa [#allocation12], 0
    %s24 = scalar_lea.sflag [#allocation12], 1
    %25 = vsyncpa %s24, 0
    loop: start=0, step=1, limit=4
    $region2: #{tpu_custom_call.1} parent=1 // loop_pre_header
      _
    $region3: #{tpu_custom_call.1} parent=1 // loop_header
      %s27 = sphi 0, %s31
      %p28 = scmp.ge.s32.totalorder %s27, 4
      %s34 = sphi 0, %s53
      %s35 = sphi 0, %s49
      %s36 = sphi 0, %s45
      %s37 = sphi 0, %s34
      %s38 = sphi 0, %s35
      %s39 = sphi 0, %s36
      %s40 = sphi 0, %s37
      %s41 = sphi 0, %s38
      %s42 = sphi 0, %s39
      %s60 = sphi 0, %s62
      %s63 = sphi 0, %s60
      %s64 = sphi 0, %s63
      %s80 = sphi 0, %s64
      %s90 = sphi 0, %s92
      %s93 = sphi 0, %s90
      %s94 = sphi 0, %s93
      %s110 = sphi 0, %s94
      %s118 = sphi 0, %s120
      %s121 = sphi 0, %s118
      %s122 = sphi 0, %s121
      %s138 = sphi 0, %s122
      %s146 = sphi 0, %s148
      %s149 = sphi 0, %s146
      %s150 = sphi 0, %s149
      %s166 = sphi 0, %s150
      %s174 = sphi 0, %s176
      %s177 = sphi 0, %s174
      %s178 = sphi 0, %s177
      %s194 = sphi 0, %s178
      %s202 = sphi 0, %s204
      %s205 = sphi 0, %s202
      %s206 = sphi 0, %s205
      %s222 = sphi 0, %s206
    $region4: #{tpu_custom_call.1} parent=1 // loop_header_branch
      %30 = sbr.rel (%p28) target = $region8
    $region5: #{tpu_custom_call.1} parent=1 // loop_body
      %s32 = ssub.s32 %s27, 1
      %s33 = ssub.s32 %s27, 2
      %s43 = sadd.s32 1, %s36
      %p44 = scmp.ge.s32.totalorder %s43, 1
      %s45 = scalar_select %p44, 0, %s43
      %s46 = sadd.s32 1, %s35
      %s47 = scalar_select %p44, %s46, %s35
      %p48 = scmp.ge.s32.totalorder %s47, 1
      %s49 = scalar_select %p48, 0, %s47
      %s50 = sadd.s32 1, %s34
      %s51 = scalar_select %p48, %s50, %s34
      %p52 = scmp.ge.s32.totalorder %s51, 2
      %s53 = scalar_select %p52, 0, %s51
      %s54 = sadd.s32 %s35, %s36
      %s55 = sadd.s32 %s49, %s45
      %s56 = ssub.s32 %s34, %s53
      %s57 = ssub.s32 %s54, %s55
      %s58 = sor.u32 %s56, %s57
      %p59 = scmp.eq.s32.totalorder %s58, 0
      %s61 = sadd.s32 %s60, 1
      %s62 = scalar_select %p59, %s60, %s61
      %p65 = pneg %p59
      %p66 = scmp.eq.s32.totalorder %s27, 1
      %p67 = por %p65, %p66
      %p68 = scmp.ne.s32.totalorder %s60, %s63
      %p69 = scmp.eq.s32.totalorder %s27, 0
      %p70 = por %p68, %p69
      %p71 = scmp.ne.s32.totalorder %s60, %s63
      %p72 = scmp.eq.s32.totalorder %s32, 1
      %p73 = por %p71, %p72
      %p74 = scmp.ne.s32.totalorder %s63, %s64
      %p75 = scmp.eq.s32.totalorder %s32, 0
      %p76 = por %p74, %p75
      %p77 = scmp.ne.s32.totalorder %s63, %s64
      %p78 = scmp.eq.s32.totalorder %s33, 1
      %p79 = por %p77, %p78
      %p81 = scmp.ne.s32.totalorder %s64, %s80
      %p82 = scmp.eq.s32.totalorder %s33, 0
      %p83 = por %p81, %p82
      %s84 = sadd.s32 %s35, %s36
      %s85 = sadd.s32 %s49, %s45
      %s86 = ssub.s32 %s34, %s53
      %s87 = ssub.s32 %s84, %s85
      %s88 = sor.u32 %s86, %s87
      %p89 = scmp.eq.s32.totalorder %s88, 0
      %s91 = sadd.s32 %s90, 1
      %s92 = scalar_select %p89, %s90, %s91
      %p95 = pneg %p89
      %p96 = scmp.eq.s32.totalorder %s27, 1
      %p97 = por %p95, %p96
      %p98 = scmp.ne.s32.totalorder %s90, %s93
      %p99 = scmp.eq.s32.totalorder %s27, 0
      %p100 = por %p98, %p99
      %p101 = scmp.ne.s32.totalorder %s90, %s93
      %p102 = scmp.eq.s32.totalorder %s32, 1
      %p103 = por %p101, %p102
      %p104 = scmp.ne.s32.totalorder %s93, %s94
      %p105 = scmp.eq.s32.totalorder %s32, 0
      %p106 = por %p104, %p105
      %p107 = scmp.ne.s32.totalorder %s93, %s94
      %p108 = scmp.eq.s32.totalorder %s33, 1
      %p109 = por %p107, %p108
      %p111 = scmp.ne.s32.totalorder %s94, %s110
      %p112 = scmp.eq.s32.totalorder %s33, 0
      %p113 = por %p111, %p112
      %s114 = ssub.s32 %s34, %s53
      %s115 = ssub.s32 %s35, %s49
      %s116 = sor.u32 %s114, %s115
      %p117 = scmp.eq.s32.totalorder %s116, 0
      %s119 = sadd.s32 %s118, 1
      %s120 = scalar_select %p117, %s118, %s119
      %p123 = pneg %p117
      %p124 = scmp.eq.s32.totalorder %s27, 1
      %p125 = por %p123, %p124
      %p126 = scmp.ne.s32.totalorder %s118, %s121
      %p127 = scmp.eq.s32.totalorder %s27, 0
      %p128 = por %p126, %p127
      %p129 = scmp.ne.s32.totalorder %s118, %s121
      %p130 = scmp.eq.s32.totalorder %s32, 1
      %p131 = por %p129, %p130
      %p132 = scmp.ne.s32.totalorder %s121, %s122
      %p133 = scmp.eq.s32.totalorder %s32, 0
      %p134 = por %p132, %p133
      %p135 = scmp.ne.s32.totalorder %s121, %s122
      %p136 = scmp.eq.s32.totalorder %s33, 1
      %p137 = por %p135, %p136
      %p139 = scmp.ne.s32.totalorder %s122, %s138
      %p140 = scmp.eq.s32.totalorder %s33, 0
      %p141 = por %p139, %p140
      %s142 = ssub.s32 %s34, %s53
      %s143 = ssub.s32 %s35, %s49
      %s144 = sor.u32 %s142, %s143
      %p145 = scmp.eq.s32.totalorder %s144, 0
      %s147 = sadd.s32 %s146, 1
      %s148 = scalar_select %p145, %s146, %s147
      %p151 = pneg %p145
      %p152 = scmp.eq.s32.totalorder %s27, 1
      %p153 = por %p151, %p152
      %p154 = scmp.ne.s32.totalorder %s146, %s149
      %p155 = scmp.eq.s32.totalorder %s27, 0
      %p156 = por %p154, %p155
      %p157 = scmp.ne.s32.totalorder %s146, %s149
      %p158 = scmp.eq.s32.totalorder %s32, 1
      %p159 = por %p157, %p158
      %p160 = scmp.ne.s32.totalorder %s149, %s150
      %p161 = scmp.eq.s32.totalorder %s32, 0
      %p162 = por %p160, %p161
      %p163 = scmp.ne.s32.totalorder %s149, %s150
      %p164 = scmp.eq.s32.totalorder %s33, 1
      %p165 = por %p163, %p164
      %p167 = scmp.ne.s32.totalorder %s150, %s166
      %p168 = scmp.eq.s32.totalorder %s33, 0
      %p169 = por %p167, %p168
      %s170 = ssub.s32 %s34, %s53
      %s171 = ssub.s32 %s35, %s49
      %s172 = sor.u32 %s170, %s171
      %p173 = scmp.eq.s32.totalorder %s172, 0
      %s175 = sadd.s32 %s174, 1
      %s176 = scalar_select %p173, %s174, %s175
      %p179 = pneg %p173
      %p180 = scmp.eq.s32.totalorder %s27, 1
      %p181 = por %p179, %p180
      %p182 = scmp.ne.s32.totalorder %s174, %s177
      %p183 = scmp.eq.s32.totalorder %s27, 0
      %p184 = por %p182, %p183
      %p185 = scmp.ne.s32.totalorder %s174, %s177
      %p186 = scmp.eq.s32.totalorder %s32, 1
      %p187 = por %p185, %p186
      %p188 = scmp.ne.s32.totalorder %s177, %s178
      %p189 = scmp.eq.s32.totalorder %s32, 0
      %p190 = por %p188, %p189
      %p191 = scmp.ne.s32.totalorder %s177, %s178
      %p192 = scmp.eq.s32.totalorder %s33, 1
      %p193 = por %p191, %p192
      %p195 = scmp.ne.s32.totalorder %s178, %s194
      %p196 = scmp.eq.s32.totalorder %s33, 0
      %p197 = por %p195, %p196
      %s198 = ssub.s32 %s34, %s53
      %s199 = ssub.s32 %s35, %s49
      %s200 = sor.u32 %s198, %s199
      %p201 = scmp.eq.s32.totalorder %s200, 0
      %s203 = sadd.s32 %s202, 1
      %s204 = scalar_select %p201, %s202, %s203
      %p207 = pneg %p201
      %p208 = scmp.eq.s32.totalorder %s27, 1
      %p209 = por %p207, %p208
      %p210 = scmp.ne.s32.totalorder %s202, %s205
      %p211 = scmp.eq.s32.totalorder %s27, 0
      %p212 = por %p210, %p211
      %p213 = scmp.ne.s32.totalorder %s202, %s205
      %p214 = scmp.eq.s32.totalorder %s32, 1
      %p215 = por %p213, %p214
      %p216 = scmp.ne.s32.totalorder %s205, %s206
      %p217 = scmp.eq.s32.totalorder %s32, 0
      %p218 = por %p216, %p217
      %p219 = scmp.ne.s32.totalorder %s205, %s206
      %p220 = scmp.eq.s32.totalorder %s33, 1
      %p221 = por %p219, %p220
      %p223 = scmp.ne.s32.totalorder %s206, %s222
      %p224 = scmp.eq.s32.totalorder %s33, 0
      %p225 = por %p223, %p224
      %p226 = scmp.le.s32.totalorder 1, %s27
      %p227 = scmp.lt.s32.totalorder %s27, 3
      %p228 = pnand %p226, %p227
      %p229 = pneg %p228
      // Predicated region
      $region9: #{tpu_custom_call.1} parent=5 // pred_check
        _
      $region10: #{tpu_custom_call.1} parent=5 // pred_check_branch
        %231 = sbr.rel (%p228) target = $region12
      $region11: #{tpu_custom_call.1} parent=5 // pred_region
        %s232 = ssub.s32 %s27, 1
      $region12: #{tpu_custom_call.1} parent=5 // pred_fallthru
        _
      %p233 = scmp.lt.s32.totalorder %s27, 2
      // Predicated region
      $region13: #{tpu_custom_call.1} parent=5 // pred_check
        %p234 = pneg %p233
      $region14: #{tpu_custom_call.1} parent=5 // pred_check_branch
        %236 = sbr.rel (%p234) target = $region16
      $region15: #{tpu_custom_call.1} parent=5 // pred_region
        // Predicated region
        $region17: #{tpu_custom_call.1} parent=15 // pred_check
          %p237 = pneg %p70
        $region18: #{tpu_custom_call.1} parent=15 // pred_check_branch
          %239 = sbr.rel (%p237) target = $region20
        $region19: #{tpu_custom_call.1} parent=15 // pred_region
          %s240 = sand.u32 %s60, 1
          %s241 = scalar_lea.sflag [#allocation3], %s240
          %s242 = sand.u32 %s60, 1
          %s243 = smul.addr %s242, 3
          %s244 = scalar_lea.vmem [#allocation2], %s243
          %s245 = sadd.s32 %s35, %s36
          %247 = vsyncadd %s241, 0
          %s248 = smul.addr %s34, 3
          %s249 = sadd.s32 %s245, %s248
          %s250 = scalar_lea.hbm %s0, %s249
          %s251 = sshll.u32 %s250, 4
          %s252 = int_to_ptr.hbm [resolvable:$true] %s251
          %s253 = sshll.u32 %s244, 4
          %s254 = int_to_ptr.vmem [resolvable:$true] %s253
          %259 = dma.hbm_to_vmem [thread:$0]  %s252, 48, %s254, %s241, 16, 16, 1
        $region20: #{tpu_custom_call.1} parent=15 // pred_fallthru
          _
        // Predicated region
        $region21: #{tpu_custom_call.1} parent=15 // pred_check
          %p260 = pneg %p100
        $region22: #{tpu_custom_call.1} parent=15 // pred_check_branch
          %262 = sbr.rel (%p260) target = $region24
        $region23: #{tpu_custom_call.1} parent=15 // pred_region
          %s263 = sand.u32 %s90, 1
          %s264 = scalar_lea.sflag [#allocation6], %s263
          %s265 = sand.u32 %s90, 1
          %s266 = smul.addr %s265, 2
          %s267 = scalar_lea.vmem [#allocation5], %s266
          %s268 = sadd.s32 %s35, %s36
          %270 = vsyncadd %s264, 0
          %s271 = sadd.s32 %s268, %s34
          %s272 = smul.addr %s271, 2
          %s273 = scalar_lea.hbm %s1, %s272
          %s275 = sshll.u32 %s273, 4
          %s276 = int_to_ptr.hbm [resolvable:$true] %s275
          %s277 = sshll.u32 %s267, 4
          %s278 = int_to_ptr.vmem [resolvable:$true] %s277
          %280 = dma.hbm_to_vmem [thread:$0]  %s276, 32, %s278, %s264
        $region24: #{tpu_custom_call.1} parent=15 // pred_fallthru
          _
      $region16: #{tpu_custom_call.1} parent=5 // pred_fallthru
        _
      %p281 = scmp.le.s32.totalorder 1, %s27
      %p282 = scmp.lt.s32.totalorder %s27, 3
      %p283 = pnand %p281, %p282
      %p284 = pneg %p283
      // Predicated region
      $region25: #{tpu_custom_call.1} parent=5 // pred_check
        _
      $region26: #{tpu_custom_call.1} parent=5 // pred_check_branch
        %286 = sbr.rel (%p283) target = $region28
      $region27: #{tpu_custom_call.1} parent=5 // pred_region
        %s287 = ssub.s32 %s27, 1
        %s288 = sand.u32 %s63, 1
        %s289 = scalar_lea.sflag [#allocation3], %s288
        %s290 = sand.u32 %s63, 1
        %s291 = smul.addr %s290, 3
        %s292 = scalar_lea.vmem [#allocation2], %s291
        // Predicated region
        $region29: #{tpu_custom_call.1} parent=27 // pred_check
          %p293 = pneg %p76
        $region30: #{tpu_custom_call.1} parent=27 // pred_check_branch
          %295 = sbr.rel (%p293) target = $region32
        $region31: #{tpu_custom_call.1} parent=27 // pred_region
          %297 = dma.done %s289, 48
        $region32: #{tpu_custom_call.1} parent=27 // pred_fallthru
          _
        %s298 = sand.u32 %s93, 1
        %s299 = scalar_lea.sflag [#allocation6], %s298
        %s300 = sand.u32 %s93, 1
        %s301 = smul.addr %s300, 2
        %s302 = scalar_lea.vmem [#allocation5], %s301
        // Predicated region
        $region33: #{tpu_custom_call.1} parent=27 // pred_check
          %p303 = pneg %p106
        $region34: #{tpu_custom_call.1} parent=27 // pred_check_branch
          %305 = sbr.rel (%p303) target = $region36
        $region35: #{tpu_custom_call.1} parent=27 // pred_region
          %307 = dma.done %s299, 32
        $region36: #{tpu_custom_call.1} parent=27 // pred_fallthru
          _
        %s308 = sand.u32 %s63, 1
        %s309 = scalar_lea.sflag [#allocation3], %s308
        %s310 = sand.u32 %s63, 1
        %s311 = smul.addr %s310, 3
        %s312 = scalar_lea.vmem [#allocation2], %s311
        %p313 = pneg %p76
        %p314 = pneg %p73
        %s315 = sand.u32 %s93, 1
        %s316 = scalar_lea.sflag [#allocation6], %s315
        %s317 = sand.u32 %s93, 1
        %s318 = smul.addr %s317, 2
        %s319 = scalar_lea.vmem [#allocation5], %s318
        %p320 = pneg %p106
        %p321 = pneg %p103
        %p322 = pneg %p134
        %p323 = pneg %p131
        %s324 = sand.u32 %s121, 1
        %s325 = scalar_lea.sflag [#allocation4], %s324
        %s326 = sand.u32 %s121, 1
        %s327 = scalar_lea.vmem [#allocation7], %s326
        %p328 = pneg %p162
        %p329 = pneg %p159
        %s330 = sand.u32 %s32, 1
        %s331 = scalar_lea.sflag [#allocation9], %s330
        %s332 = sand.u32 %s149, 1
        %s333 = scalar_lea.vmem [#allocation8], %s332
        %p334 = pneg %p190
        %p335 = pneg %p187
        %s336 = sand.u32 %s32, 1
        %s337 = scalar_lea.sflag [#allocation9], %s336
        %s338 = sand.u32 %s177, 1
        %s339 = scalar_lea.vmem [#allocation10], %s338
        %p340 = pneg %p218
        %p341 = pneg %p215
        %s342 = sand.u32 %s205, 1
        %s343 = scalar_lea.sflag [#allocation12], %s342
        %s344 = sand.u32 %s205, 1
        %s345 = scalar_lea.vmem [#allocation11], %s344
        %s346 = sadd.s32 %s38, %s39
        %s347 = sadd.s32 %s38, %s39
        %v348 = vld [vmem:[%s292] sm:$0x1]
        %v349 = vld [vmem:[%s292 + $0x1] sm:$0x1]
        %v350 = vld [vmem:[%s292 + $0x2] sm:$0x1]
        %v351 = vunpack.c.l.bf16 %v348
        %v352 = vunpack.c.l.bf16 %v349
        %v353 = vunpack.c.l.bf16 %v350
        %v354 = vld [vmem:[%s302] sm:$0x3]
        %vm355 = vcmask 1041408
        %v356 = vsel %vm355, %v351, -inf
        %v357 = vsel %vm355, %v352, -inf
        %v358 = vsel %vm355, %v353, -inf
        %v359 = vmax.f32 %v356, %v357
        %v360 = vmax.f32 %v359, %v358
        %v361 = vsub.f32 %v351, %v360
        %v362 = vsub.f32 %v352, %v360
        %v363 = vsub.f32 %v353, %v360
        %v364 = vmul.f32 %v361, 1.442695
        %v365 = vpow.pop %v364
        %v366 = vmul.f32 %v362, 1.442695
        %v367 = vpow.pop %v366
        %v368 = vmul.f32 %v363, 1.442695
        %v369 = vpow.pop %v368
        %v370 = vsel %vm355, %v365, 0.0
        %v371 = vsel %vm355, %v367, 0.0
        %v372 = vadd.f32 %v370, %v371
        %v373 = vsel %vm355, %v369, 0.0
        %v374 = vadd.f32 %v372, %v373
        %v375 = vlog2.pop %v374
        %v376 = vmul.f32 %v375, 0.6931472
        %vm377 = vcmp.eq.s32.totalorder %v354, 1
        %v378 = vsel %vm377, %v362, %v363
        %vm379 = vcmp.eq.s32.totalorder %v354, 0
        %v380 = vsel %vm379, %v361, %v378
        %v381 = vsub.f32 %v380, %v376
        %v382 = vmul.f32 %v381, 1.442695
        %v383 = vpow.pop %v382
        %v384 = vsub.f32 1.0, %v383
        %v385 = vmul.f32 %v384, %v384
        %v386 = vsub.f32 0.0, %v385
        %v387 = vmul.f32 %v386, %v381
        %v388 = vsub.f32 %v363, %v376
        %v389 = vmul.f32 %v388, 1.442695
        %v390 = vpow.pop %v389
        %vm391 = vcmp.eq.s32.totalorder %v354, 2
        %v392 = vsel %vm391, 1, 0
        %v393 = vcvt.s32.f32 %v392
        %v394 = vsub.f32 1.0, %v390
        %v395 = vmul.f32 %v393, %v394
        %p396 = scmp.eq.s32.totalorder %s39, 0
        // Predicated region
        $region37: #{tpu_custom_call.1} parent=27 // pred_check
          %p397 = pneg %p396
        $region38: #{tpu_custom_call.1} parent=27 // pred_check_branch
          %399 = sbr.rel (%p397) target = $region40
        $region39: #{tpu_custom_call.1} parent=27 // pred_region
          %400 = vst [vmem:[%s327] sm:$0x1] 0.0
          %401 = vst [vmem:[%s333] sm:$0x1] 0.0
          %402 = vst [vmem:[%s339] sm:$0x1] 0.0
          %403 = vst [vmem:[%s345] sm:$0x1] 0.0
        $region40: #{tpu_custom_call.1} parent=27 // pred_fallthru
          _
        %v404 = vld [vmem:[%s327] sm:$0x1]
        %v405 = vsel %vm355, %v387, 0.0
        %v406 = vrot.slane %v405, 4
        %v407 = vadd.f32 %v405, %v406
        %v408 = vrot.slane %v407, 2
        %v409 = vadd.f32 %v407, %v408
        %v410 = vrot.slane %v409, 1
        %v411 = vadd.f32 %v409, %v410
        %v412 = vadd.f32 %v404, %v411
        %413 = vst [vmem:[%s327] sm:$0x1] %v412
        %v414 = vld [vmem:[%s333] sm:$0x1]
        %v415 = vsel %vm355, %v385, 0.0
        %v416 = vrot.slane %v415, 4
        %v417 = vadd.f32 %v415, %v416
        %v418 = vrot.slane %v417, 2
        %v419 = vadd.f32 %v417, %v418
        %v420 = vrot.slane %v419, 1
        %v421 = vadd.f32 %v419, %v420
        %v422 = vadd.f32 %v414, %v421
        %423 = vst [vmem:[%s333] sm:$0x1] %v422
        %v424 = vld [vmem:[%s339] sm:$0x1]
        %v425 = vsel %vm355, %v395, 0.0
        %v426 = vrot.slane %v425, 4
        %v427 = vadd.f32 %v425, %v426
        %v428 = vrot.slane %v427, 2
        %v429 = vadd.f32 %v427, %v428
        %v430 = vrot.slane %v429, 1
        %v431 = vadd.f32 %v429, %v430
        %v432 = vadd.f32 %v424, %v431
        %433 = vst [vmem:[%s339] sm:$0x1] %v432
        %v434 = vld [vmem:[%s345] sm:$0x1]
        %v435 = vsel %vm355, %v393, 0.0
        %v436 = vrot.slane %v435, 4
        %v437 = vadd.f32 %v435, %v436
        %v438 = vrot.slane %v437, 2
        %v439 = vadd.f32 %v437, %v438
        %v440 = vrot.slane %v439, 1
        %v441 = vadd.f32 %v439, %v440
        %v442 = vadd.f32 %v434, %v441
        %443 = vst [vmem:[%s345] sm:$0x1] %v442
        %s444 = sand.u32 %s121, 1
        %s445 = scalar_lea.sflag [#allocation4], %s444
        %s446 = sand.u32 %s121, 1
        %s447 = scalar_lea.vmem [#allocation7], %s446
        %s448 = sand.u32 %s32, 1
        %s449 = scalar_lea.sflag [#allocation9], %s448
        %s450 = sand.u32 %s149, 1
        %s451 = scalar_lea.vmem [#allocation8], %s450
        %s452 = sand.u32 %s32, 1
        %s453 = scalar_lea.sflag [#allocation9], %s452
        %s454 = sand.u32 %s177, 1
        %s455 = scalar_lea.vmem [#allocation10], %s454
        %s456 = sand.u32 %s205, 1
        %s457 = scalar_lea.sflag [#allocation12], %s456
        %s458 = sand.u32 %s205, 1
        %s459 = scalar_lea.vmem [#allocation11], %s458
        // Predicated region
        $region41: #{tpu_custom_call.1} parent=27 // pred_check
          %p460 = pneg %p131
        $region42: #{tpu_custom_call.1} parent=27 // pred_check_branch
          %462 = sbr.rel (%p460) target = $region44
        $region43: #{tpu_custom_call.1} parent=27 // pred_region
          %464 = vsyncadd %s445, 0
          %s465 = sadd.s32 %s38, %s37
          %s466 = scalar_lea.hbm %s2, %s465
          %s468 = sshll.u32 %s447, 4
          %s469 = int_to_ptr.vmem [resolvable:$true] %s468
          %s470 = sshll.u32 %s466, 4
          %s471 = int_to_ptr.hbm [resolvable:$true] %s470
          %473 = dma.vmem_to_hbm [thread:$0]  %s469, 16, %s471, %s445
        $region44: #{tpu_custom_call.1} parent=27 // pred_fallthru
          _
        // Predicated region
        $region45: #{tpu_custom_call.1} parent=27 // pred_check
          %p474 = pneg %p159
        $region46: #{tpu_custom_call.1} parent=27 // pred_check_branch
          %476 = sbr.rel (%p474) target = $region48
        $region47: #{tpu_custom_call.1} parent=27 // pred_region
          %478 = vsyncadd %s449, 0
          %s479 = sadd.s32 %s38, %s37
          %s480 = scalar_lea.hbm %s3, %s479
          %s482 = sshll.u32 %s451, 4
          %s483 = int_to_ptr.vmem [resolvable:$true] %s482
          %s484 = sshll.u32 %s480, 4
          %s485 = int_to_ptr.hbm [resolvable:$true] %s484
          %487 = dma.vmem_to_hbm [thread:$0]  %s483, 16, %s485, %s449
        $region48: #{tpu_custom_call.1} parent=27 // pred_fallthru
          _
        // Predicated region
        $region49: #{tpu_custom_call.1} parent=27 // pred_check
          %p488 = pneg %p187
        $region50: #{tpu_custom_call.1} parent=27 // pred_check_branch
          %490 = sbr.rel (%p488) target = $region52
        $region51: #{tpu_custom_call.1} parent=27 // pred_region
          %492 = vsyncadd %s453, 0
          %s493 = sadd.s32 %s38, %s37
          %s494 = scalar_lea.hbm %s4, %s493
          %s496 = sshll.u32 %s455, 4
          %s497 = int_to_ptr.vmem [resolvable:$true] %s496
          %s498 = sshll.u32 %s494, 4
          %s499 = int_to_ptr.hbm [resolvable:$true] %s498
          %501 = dma.vmem_to_hbm [thread:$0]  %s497, 16, %s499, %s453
        $region52: #{tpu_custom_call.1} parent=27 // pred_fallthru
          _
        // Predicated region
        $region53: #{tpu_custom_call.1} parent=27 // pred_check
          %p502 = pneg %p215
        $region54: #{tpu_custom_call.1} parent=27 // pred_check_branch
          %504 = sbr.rel (%p502) target = $region56
        $region55: #{tpu_custom_call.1} parent=27 // pred_region
          %506 = vsyncadd %s457, 0
          %s507 = sadd.s32 %s38, %s37
          %s508 = scalar_lea.hbm %s5, %s507
          %s510 = sshll.u32 %s459, 4
          %s511 = int_to_ptr.vmem [resolvable:$true] %s510
          %s512 = sshll.u32 %s508, 4
          %s513 = int_to_ptr.hbm [resolvable:$true] %s512
          %515 = dma.vmem_to_hbm [thread:$0]  %s511, 16, %s513, %s457
        $region56: #{tpu_custom_call.1} parent=27 // pred_fallthru
          _
      $region28: #{tpu_custom_call.1} parent=5 // pred_fallthru
        _
      %p516 = scmp.le.s32.totalorder 2, %s27
      // Predicated region
      $region57: #{tpu_custom_call.1} parent=5 // pred_check
        %p517 = pneg %p516
      $region58: #{tpu_custom_call.1} parent=5 // pred_check_branch
        %519 = sbr.rel (%p517) target = $region60
      $region59: #{tpu_custom_call.1} parent=5 // pred_region
        %s520 = ssub.s32 %s27, 2
        // Predicated region
        $region61: #{tpu_custom_call.1} parent=59 // pred_check
          %p521 = pneg %p137
        $region62: #{tpu_custom_call.1} parent=59 // pred_check_branch
          %523 = sbr.rel (%p521) target = $region64
        $region63: #{tpu_custom_call.1} parent=59 // pred_region
          %s524 = sand.u32 %s122, 1
          %s525 = scalar_lea.sflag [#allocation4], %s524
          %s526 = sand.u32 %s122, 1
          %s527 = scalar_lea.vmem [#allocation7], %s526
          %529 = dma.done %s525, 16
        $region64: #{tpu_custom_call.1} parent=59 // pred_fallthru
          _
        // Predicated region
        $region65: #{tpu_custom_call.1} parent=59 // pred_check
          %p530 = pneg %p165
        $region66: #{tpu_custom_call.1} parent=59 // pred_check_branch
          %532 = sbr.rel (%p530) target = $region68
        $region67: #{tpu_custom_call.1} parent=59 // pred_region
          %s533 = sand.u32 %s33, 1
          %s534 = scalar_lea.sflag [#allocation9], %s533
          %s535 = sand.u32 %s150, 1
          %s536 = scalar_lea.vmem [#allocation8], %s535
          %538 = dma.done %s534, 16
        $region68: #{tpu_custom_call.1} parent=59 // pred_fallthru
          _
        // Predicated region
        $region69: #{tpu_custom_call.1} parent=59 // pred_check
          %p539 = pneg %p193
        $region70: #{tpu_custom_call.1} parent=59 // pred_check_branch
          %541 = sbr.rel (%p539) target = $region72
        $region71: #{tpu_custom_call.1} parent=59 // pred_region
          %s542 = sand.u32 %s33, 1
          %s543 = scalar_lea.sflag [#allocation9], %s542
          %s544 = sand.u32 %s178, 1
          %s545 = scalar_lea.vmem [#allocation10], %s544
          %547 = dma.done %s543, 16
        $region72: #{tpu_custom_call.1} parent=59 // pred_fallthru
          _
        // Predicated region
        $region73: #{tpu_custom_call.1} parent=59 // pred_check
          %p548 = pneg %p221
        $region74: #{tpu_custom_call.1} parent=59 // pred_check_branch
          %550 = sbr.rel (%p548) target = $region76
        $region75: #{tpu_custom_call.1} parent=59 // pred_region
          %s551 = sand.u32 %s206, 1
          %s552 = scalar_lea.sflag [#allocation12], %s551
          %s553 = sand.u32 %s206, 1
          %s554 = scalar_lea.vmem [#allocation11], %s553
          %556 = dma.done %s552, 16
        $region76: #{tpu_custom_call.1} parent=59 // pred_fallthru
          _
      $region60: #{tpu_custom_call.1} parent=5 // pred_fallthru
        _
    $region6: #{tpu_custom_call.1} parent=1 // loop_footer
      %s31 = sadd.s32 1, %s27
    $region7: #{tpu_custom_call.1} parent=1 // loop_footer_branch
      %26 = sbr.rel target = $region3
    $region8: #{tpu_custom_call.1} parent=1 // loop_exit
      _
    %557 = vsyncpa [#allocation3], 1
    %s558 = scalar_lea.sflag [#allocation3], 1
    %559 = vsyncpa %s558, 1
    %560 = vsyncpa [#allocation6], 1
    %s561 = scalar_lea.sflag [#allocation6], 1
    %562 = vsyncpa %s561, 1
    %563 = vsyncpa [#allocation4], 1
    %s564 = scalar_lea.sflag [#allocation4], 1
    %565 = vsyncpa %s564, 1
    %566 = vsyncpa [#allocation9], 1
    %s567 = scalar_lea.sflag [#allocation9], 1
    %568 = vsyncpa %s567, 1
    %569 = vsyncpa [#allocation12], 1
    %s570 = scalar_lea.sflag [#allocation12], 1
    %571 = vsyncpa %s570, 1

</llo_original>
